<compile_context>
chip_gen: v7x
topology: tpu7x:2x2x1
jax: 0.10.0
libtpu: 0.0.40
codegen_flags: <defaults>
</compile_context>

<pallas_src>
import functools
import itertools

import numpy as np
import jax
import jax.numpy as jnp
from jax import lax
from jax.experimental import pallas as pl
from jax.experimental.pallas import tpu as pltpu

TEMPERATURE = 0.07
NOUN_THRESHOLD = 0.6
EPS = 1e-8
LANE = 128
NEG_INF = -1e30

_VMEM = pl.BlockSpec(memory_space=pltpu.MemorySpace.VMEM)


def _round_up(x, m):
    return ((x + m - 1) // m) * m


# ------------------------------------------------------------------ in-kernel helpers
def _l2_normalize(x):
    ssq = jnp.sum(x * x, axis=-1, keepdims=True)
    # rsqrt -> EUP slot instead of VALU divide.
    return x * lax.rsqrt(jnp.maximum(ssq, EPS * EPS))


def _dot_nt(a, b):
    """a:[M,D] x b:[N,D] -> [M,N] f32; contract last dims (no RHS transpose)."""
    return lax.dot_general(a, b, dimension_numbers=(((1,), (1,)), ((), ())),
                           preferred_element_type=jnp.float32)


# ------------------------------------------------------------------ kernel 1: fused prep
def _prep_kernel(noun_ref, pred_ref, gt_idx_ref, nnorm_ref, pnorm_ref, wsim_ref):
    n = _l2_normalize(noun_ref[...])                   # [V_pad, Dp]  f32
    p = _l2_normalize(pred_ref[...])                   # [BQ_pad, Dp] f32
    nnorm_ref[...] = n.astype(nnorm_ref.dtype)         # bf16 copy for CE path
    pnorm_ref[...] = p.astype(pnorm_ref.dtype)         # bf16 copy for CE path

    # In-kernel gather of gt rows from the already-normalized nouns
    # (one-hot @ nouns: MXU work, no extra normalization of gt).
    bw = gt_idx_ref.shape[0]
    v = n.shape[0]
    col = lax.broadcasted_iota(jnp.int32, (bw, v), 1)
    onehot = (col == gt_idx_ref[...]).astype(jnp.float32)        # [BW_pad, V_pad]
    gt = lax.dot_general(onehot, n, dimension_numbers=(((1,), (0,)), ((), ())),
                         preferred_element_type=jnp.float32)     # [BW_pad, Dp]

    # Folded, lane-dense word-sim cost matrix: -cos(gt, pred), [BW_pad, BQ_pad(=128k)]
    wsim_ref[...] = -_dot_nt(gt, p)


def prep(noun_p, pred_fold, gt_idx):
    v_pad, dp = noun_p.shape
    bq_pad, _ = pred_fold.shape
    bw_pad = gt_idx.shape[0]
    return pl.pallas_call(
        _prep_kernel,
        out_shape=(jax.ShapeDtypeStruct((v_pad, dp), jnp.bfloat16),   # noun_norm
                   jax.ShapeDtypeStruct((bq_pad, dp), jnp.bfloat16),  # pred_norm
                   jax.ShapeDtypeStruct((bw_pad, bq_pad), jnp.float32)),  # -cos
        in_specs=[_VMEM, _VMEM, _VMEM],
        out_specs=(_VMEM, _VMEM, _VMEM),
    )(noun_p, pred_fold, gt_idx)


# ------------------------------------------------------------------ kernel 2: tiled masked CE
def _ce_kernel(sel_ref, tgtn_ref, tgt_ref, noun_ref, loss_ref,
               m_sc, l_sc, tgt_sc, *, inv_temp, threshold,
               n_rows, n_cols, t_tile, v_tile):
    t = pl.program_id(0)
    v = pl.program_id(1)

    @pl.when(v == 0)
    def _():
        m_sc[...] = jnp.full(m_sc.shape, NEG_INF, jnp.float32)
        l_sc[...] = jnp.zeros(l_sc.shape, jnp.float32)
        tgt_sc[...] = jnp.zeros(tgt_sc.shape, jnp.float32)

    # bf16 operands, f32 accumulation (MXU).  Inputs are pre-normalized.
    sim = _dot_nt(sel_ref[...], noun_ref[...])       # [t_tile, v_tile]
    nsim = _dot_nt(tgtn_ref[...], noun_ref[...])     # [t_tile, v_tile]

    col_g = lax.broadcasted_iota(jnp.int32, sim.shape, 1) + v * v_tile
    tgt = tgt_ref[...]                               # [t_tile, 1] int32
    is_tgt = col_g == tgt
    # masked_fill(noun_sim[target] > thr, -1); exclude the target column itself
    # (original zeroes the gram diagonal, so with thr > 0 it is never masked).
    mask = jnp.logical_and(nsim > threshold, jnp.logical_not(is_tgt))
    logits = jnp.where(mask, -1.0, sim) * inv_temp
    logits = jnp.where(col_g < n_cols, logits, NEG_INF)   # kill V-padding columns

    # online log-sum-exp across V tiles
    m_prev = m_sc[...]
    m_new = jnp.maximum(m_prev, jnp.max(logits, axis=-1, keepdims=True))
    l_sc[...] = (l_sc[...] * jnp.exp(m_prev - m_new)
                 + jnp.sum(jnp.exp(logits - m_new), axis=-1, keepdims=True))
    m_sc[...] = m_new
    # target logit (target column is never masked, lives in exactly one V tile)
    tgt_sc[...] += jnp.sum(jnp.where(is_tgt, logits, 0.0), axis=-1, keepdims=True)

    @pl.when(v == pl.num_programs(1) - 1)
    def _():
        row_g = lax.broadcasted_iota(jnp.int32, (t_tile, 1), 0) + t * t_tile
        per_row = m_sc[...] + jnp.log(l_sc[...]) - tgt_sc[...]
        loss_ref[...] = jnp.where(row_g < n_rows, per_row, 0.0)  # zero padded rows


def masked_cross_entropy(selected, tgt_noun, targets, noun_norm, *,
                         n_rows, n_cols, temperature, threshold, t_tile, v_tile):
    t_pad, dp = selected.shape
    v_pad, _ = noun_norm.shape
    grid = (t_pad // t_tile, v_pad // v_tile)
    kernel = functools.partial(
        _ce_kernel, inv_temp=1.0 / temperature, threshold=threshold,
        n_rows=n_rows, n_cols=n_cols, t_tile=t_tile, v_tile=v_tile)
    # TODO(synk): targets could ride in SMEM via scalar prefetch; VMEM [T,1] is
    # fine since nothing here needs an index_map on them.
    per_row = pl.pallas_call(
        kernel,
        out_shape=jax.ShapeDtypeStruct((t_pad, 1), jnp.float32),
        grid=grid,
        in_specs=[
            pl.BlockSpec((t_tile, dp), lambda t, v: (t, 0)),   # selected (resident over v)
            pl.BlockSpec((t_tile, dp), lambda t, v: (t, 0)),   # noun_norm[targets]
            pl.BlockSpec((t_tile, 1), lambda t, v: (t, 0)),    # targets
            pl.BlockSpec((v_tile, dp), lambda t, v: (v, 0)),   # streamed noun tiles
        ],
        out_specs=pl.BlockSpec((t_tile, 1), lambda t, v: (t, 0)),
        scratch_shapes=[pltpu.VMEM((t_tile, 1), jnp.float32)] * 3,
        compiler_params=pltpu.CompilerParams(
            dimension_semantics=("parallel", "arbitrary")),    # T parallel (v7x megacore)
    )(selected, tgt_noun, targets, noun_norm)
    return jnp.sum(per_row) / n_rows   # divide by GLOBAL T


# ------------------------------------------------------------------ host-side matching
def _linear_sum_assignment(cost):
    # TODO(synk): Hungarian matching (scipy.linear_sum_assignment) has no Pallas
    # equivalent; it is data-dependent discrete optimisation run on host (the
    # original module also runs it on CPU).  Brute force is exact at these sizes.
    n, m = cost.shape
    best_cost, best_cols = None, None
    for cols in itertools.permutations(range(m), n):
        s = float(sum(cost[r, c] for r, c in zip(range(n), cols)))
        if best_cost is None or s < best_cost:
            best_cost, best_cols = s, cols
    return np.arange(n), np.array(best_cols, dtype=np.int64)


# ------------------------------------------------------------------ full forward
def word_contrastive_loss(noun_embeds, pred_noun_embeds, noun_gt_inds,
                          temperature=TEMPERATURE, noun_threshold=NOUN_THRESHOLD):
    V, D = noun_embeds.shape
    B, Q, _ = pred_noun_embeds.shape
    W = noun_gt_inds.shape[1]

    dp = _round_up(D, LANE)               # lane-pad features; zeros change nothing
    # V tiling for the CE kernel, sized conservatively for v7x's 64 MiB VMEM:
    # double-buffered bf16 noun tiles (2 * 512 * dp * 2B) + live f32 tiles stay tiny.
    V_TILE_MAX = 512
    v_pad8 = _round_up(V, 8)
    if v_pad8 <= V_TILE_MAX:
        v_tile, v_pad = v_pad8, v_pad8
    else:
        v_tile, v_pad = V_TILE_MAX, _round_up(V, V_TILE_MAX)

    bq_pad = _round_up(B * Q, LANE)       # lane-dense word-sim output columns
    bw_pad = _round_up(B * W, 8)

    noun_p = jnp.pad(noun_embeds.astype(jnp.float32),
                     ((0, v_pad - V), (0, dp - D)))
    pred_fold = jnp.pad(pred_noun_embeds.astype(jnp.float32).reshape(B * Q, D),
                        ((0, bq_pad - B * Q), (0, dp - D)))
    gt_idx = jnp.pad(noun_gt_inds.reshape(-1).astype(jnp.int32),
                     (0, bw_pad - B * W)).reshape(-1, 1)

    # Pallas launch #1 (fused): normalized nouns / preds (bf16) + folded word-sim (f32)
    noun_norm, pred_norm, wsim = prep(noun_p, pred_fold, gt_idx)

    # Host: Hungarian matching per sample (mirrors .detach().cpu() + scipy path)
    ws = np.asarray(jax.device_get(wsim))
    inds = np.asarray(jax.device_get(noun_gt_inds))
    flat_sel, targets = [], []
    for i in range(B):
        valid = inds[i] != 0
        n = int(valid.sum())
        if n == 0:
            continue
        cost = ws[i * W:(i + 1) * W, i * Q:(i + 1) * Q][valid]    # [n, Q]
        _, cols = _linear_sum_assignment(cost)
        flat_sel.extend(i * Q + int(c) for c in cols)
        targets.extend(inds[i][valid].tolist())

    T = len(targets)
    if T == 0:
        # PyTorch would raise on torch.cat([]); return a well-defined 0 loss.
        return jnp.float32(0.0)

    flat_sel = jnp.asarray(flat_sel, jnp.int32)
    targets_j = jnp.asarray(targets, jnp.int32)

    T_TILE_MAX = 256
    t_pad8 = _round_up(T, 8)
    if t_pad8 <= T_TILE_MAX:
        t_tile, t_pad = t_pad8, t_pad8
    else:
        t_tile, t_pad = T_TILE_MAX, _round_up(T, T_TILE_MAX)

    # Gathers from already-normalized device arrays (no re-normalization in CE).
    selected = jnp.pad(jnp.take(pred_norm, flat_sel, axis=0),
                       ((0, t_pad - T), (0, 0)))                  # [T_pad, Dp] bf16
    tgt_noun = jnp.pad(jnp.take(noun_norm, targets_j, axis=0),
                       ((0, t_pad - T), (0, 0)))                  # [T_pad, Dp] bf16
    targets_p = jnp.pad(targets_j, (0, t_pad - T)).reshape(-1, 1)  # [T_pad, 1]

    # Pallas launch #2: tiled online-LSE cross-entropy, threshold mask in-kernel
    return masked_cross_entropy(selected, tgt_noun, targets_p, noun_norm,
                                n_rows=T, n_cols=V,
                                temperature=temperature, threshold=noun_threshold,
                                t_tile=t_tile, v_tile=v_tile)


# ------------------------------------------------------------------ pure-numpy reference
def ref_loss(noun_np, pred_np, inds_np, temperature, threshold):
    def cos(a, b):
        an = a / np.maximum(np.linalg.norm(a, axis=-1, keepdims=True), EPS)
        bn = b / np.maximum(np.linalg.norm(b, axis=-1, keepdims=True), EPS)
        return an @ bn.T

    B = pred_np.shape[0]
    sample_idx, col_idx, targets = [], [], []
    for i in range(B):
        valid = inds_np[i] != 0
        n = int(valid.sum())
        if n == 0:
            continue
        gt = noun_np[inds_np[i][valid]]
        c = -cos(gt, pred_np[i])
        _, cols = _linear_sum_assignment(c)
        sample_idx.extend([i] * n)
        col_idx.extend(cols.tolist())
        targets.extend(inds_np[i][valid].tolist())

    selected = pred_np[sample_idx, col_idx]
    sim_all = cos(selected, noun_np)
    noun_sim = cos(noun_np, noun_np)
    np.fill_diagonal(noun_sim, 0.0)
    mask = noun_sim[targets] > threshold
    logits = np.where(mask, -1.0, sim_all) / temperature
    logits = logits - logits.max(-1, keepdims=True)
    logp = logits - np.log(np.exp(logits).sum(-1, keepdims=True))
    T = len(targets)
    return float(-logp[np.arange(T), np.array(targets)].mean())


# ------------------------------------------------------------------ main
if __name__ == "__main__":
    key = jax.random.PRNGKey(0)
    k1, k2 = jax.random.split(key)

    V, D = 16, 32       # noun vocabulary size, embedding dim
    B, Q, W = 2, 8, 4   # batch, predicted nouns per sample, max gt words per sample

    noun_embeds = jax.random.normal(k1, (V, D), jnp.float32)
    pred_noun_embeds = jax.random.normal(k2, (B, Q, D), jnp.float32)
    noun_gt_inds = jnp.array([[3, 7, 0, 0],
                              [1, 2, 9, 0]], dtype=jnp.int32)   # 0 == padding

    loss = word_contrastive_loss(noun_embeds, pred_noun_embeds, noun_gt_inds)
    loss = jax.block_until_ready(loss)

    ref = ref_loss(np.asarray(noun_embeds), np.asarray(pred_noun_embeds),
                   np.asarray(noun_gt_inds), TEMPERATURE, NOUN_THRESHOLD)

    assert np.isfinite(float(loss)), "loss is not finite"
    assert abs(float(loss) - ref) < 5e-2, (float(loss), ref)
    print("KERNEL_OK")
</pallas_src>

<mosaic_0001>
module attributes {stable_mosaic.version = 11 : i64} {
  func.func @_prep_kernel(%arg0: memref<16x128xf32, #tpu.memory_space<vmem>>, %arg1: memref<128x128xf32, #tpu.memory_space<vmem>>, %arg2: memref<8x1xi32, #tpu.memory_space<vmem>>, %arg3: memref<16x128xbf16, #tpu.memory_space<vmem>>, %arg4: memref<128x128xbf16, #tpu.memory_space<vmem>>, %arg5: memref<8x128xf32, #tpu.memory_space<vmem>>) attributes {dimension_semantics = [], scalar_prefetch = 0 : i64, scratch_operands = 0 : i64, tpu.core_type = #tpu.core_type<tc>} {
    %c0 = arith.constant 0 : index
    %c0_0 = arith.constant 0 : index
    %0 = vector.load %arg0[%c0, %c0_0] : memref<16x128xf32, #tpu.memory_space<vmem>>, vector<16x128xf32>
    %1 = arith.mulf %0, %0 : vector<16x128xf32>
    %cst = arith.constant dense<0.000000e+00> : vector<16xf32>
    %2 = vector.multi_reduction <add>, %1, %cst [1] : vector<16x128xf32> to vector<16xf32>
    %3 = vector.shape_cast %2 : vector<16xf32> to vector<16x1xf32>
    %cst_1 = arith.constant 1.000000e-16 : f32
    %4 = vector.broadcast %cst_1 : f32 to vector<16x1xf32>
    %5 = arith.maximumf %3, %4 : vector<16x1xf32>
    %6 = math.rsqrt %5 : vector<16x1xf32>
    %7 = vector.broadcast %6 : vector<16x1xf32> to vector<16x128xf32>
    %8 = arith.mulf %0, %7 : vector<16x128xf32>
    %c0_2 = arith.constant 0 : index
    %c0_3 = arith.constant 0 : index
    %9 = vector.load %arg1[%c0_2, %c0_3] : memref<128x128xf32, #tpu.memory_space<vmem>>, vector<128x128xf32>
    %10 = arith.mulf %9, %9 : vector<128x128xf32>
    %cst_4 = arith.constant dense<0.000000e+00> : vector<128xf32>
    %11 = vector.multi_reduction <add>, %10, %cst_4 [1] : vector<128x128xf32> to vector<128xf32>
    %12 = vector.shape_cast %11 : vector<128xf32> to vector<128x1xf32>
    %cst_5 = arith.constant 1.000000e-16 : f32
    %13 = vector.broadcast %cst_5 : f32 to vector<128x1xf32>
    %14 = arith.maximumf %12, %13 : vector<128x1xf32>
    %15 = math.rsqrt %14 : vector<128x1xf32>
    %16 = vector.broadcast %15 : vector<128x1xf32> to vector<128x128xf32>
    %17 = arith.mulf %9, %16 : vector<128x128xf32>
    %18 = arith.truncf %8 : vector<16x128xf32> to vector<16x128xbf16>
    %c0_6 = arith.constant 0 : index
    %c0_7 = arith.constant 0 : index
    %19 = vector.load %arg3[%c0_6, %c0_7] : memref<16x128xbf16, #tpu.memory_space<vmem>>, vector<16x128xbf16>
    tpu.vector_store %arg3[%c0_6, %c0_7], %18 {strides = array<i32>} : memref<16x128xbf16, #tpu.memory_space<vmem>>, vector<16x128xbf16>,
    %20 = arith.truncf %17 : vector<128x128xf32> to vector<128x128xbf16>
    %c0_8 = arith.constant 0 : index
    %c0_9 = arith.constant 0 : index
    %21 = vector.load %arg4[%c0_8, %c0_9] : memref<128x128xbf16, #tpu.memory_space<vmem>>, vector<128x128xbf16>
    tpu.vector_store %arg4[%c0_8, %c0_9], %20 {strides = array<i32>} : memref<128x128xbf16, #tpu.memory_space<vmem>>, vector<128x128xbf16>,
    %22 = tpu.iota {dimensions = array<i32: 1>} : vector<8x16xi32>
    %c0_10 = arith.constant 0 : index
    %c0_11 = arith.constant 0 : index
    %23 = vector.load %arg2[%c0_10, %c0_11] : memref<8x1xi32, #tpu.memory_space<vmem>>, vector<8x1xi32>
    %24 = vector.broadcast %23 : vector<8x1xi32> to vector<8x16xi32>
    %25 = arith.cmpi eq, %22, %24 : vector<8x16xi32>
    %26 = arith.extui %25 : vector<8x16xi1> to vector<8x16xi32>
    %27 = arith.sitofp %26 : vector<8x16xi32> to vector<8x16xf32>
    %cst_12 = arith.constant dense<0.000000e+00> : vector<8x128xf32>
    %28 = tpu.matmul %27, %8, %cst_12 {dimension_numbers = #tpu.dot_dimension_numbers<[1], [0], [0], [1], [0, 0, 1, 1], [], []>} : vector<8x16xf32>, vector<16x128xf32>, vector<8x128xf32> -> vector<8x128xf32>
    %cst_13 = arith.constant dense<0.000000e+00> : vector<8x128xf32>
    %29 = tpu.matmul %28, %17, %cst_13 {dimension_numbers = #tpu.dot_dimension_numbers<[1], [1], [0], [0], [0, 0, 1, 0], [], []>} : vector<8x128xf32>, vector<128x128xf32>, vector<8x128xf32> -> vector<8x128xf32>
    %cst_14 = arith.constant 0.000000e+00 : f32
    %30 = vector.broadcast %cst_14 : f32 to vector<8x128xf32>
    %31 = arith.subf %30, %29 : vector<8x128xf32>
    %c0_15 = arith.constant 0 : index
    %c0_16 = arith.constant 0 : index
    %32 = vector.load %arg5[%c0_15, %c0_16] : memref<8x128xf32, #tpu.memory_space<vmem>>, vector<8x128xf32>
    tpu.vector_store %arg5[%c0_15, %c0_16], %31 {strides = array<i32>} : memref<8x128xf32, #tpu.memory_space<vmem>>, vector<8x128xf32>,
    return
  }
}

</mosaic_0001>

<llo_original>
// kernel: tpu_custom_call.1
$region0: #{tpu_custom_call.1}
  #allocation0 [shape = 'u32[]', space=smem, size = 0x4, offset = 0x4, fixed_abs, tag = 'smem constant byte address 0x4 - core index']
  #allocation1 [shape = 'u32[144,128]{1,0:T(1,128)}', space=vmem, size = 0x12000, scoped, tag = 'internal scratch']
  %s0 = inlined_call_operand.hbm [shape: f32[16,128], index: 0, kind: input, shape index: {}]
  %s1 = inlined_call_operand.hbm [shape: f32[128,128], index: 1, kind: input, shape index: {}]
  %s2 = inlined_call_operand.vmem [shape: s32[8,1], index: 2, kind: input, shape index: {}]
  %s3 = inlined_call_operand.hbm [shape: bf16[16,128], index: 3, kind: output, shape index: {0}]
  %s4 = inlined_call_operand.hbm [shape: bf16[128,128], index: 4, kind: output, shape index: {1}]
  %s5 = inlined_call_operand.hbm [shape: f32[8,128], index: 5, kind: output, shape index: {2}]
  %6 = xla_tuple %s3, %s4, %s5
  %s7 = sld [smem:[#allocation0]]
  $region46: #{tpu_custom_call.1} parent=0
    _
  %s9 = ssub.s32 1, %s7
  %s10 = scalar_select 0, %s9, %s7
  $region1: #{tpu_custom_call.1} parent=0
    #allocation2 [shape = 'u8[8192]{0}', space=vmem, size = 0x2000, scoped, tag = 'input window, operand 0, single buffered']
    #allocation3 [shape = 's32[1]{0}', space=sflag, size = 0x4, scoped, tag = 'scoped memory for tpu_custom_call.1']
    #allocation4 [shape = 's32[1]{0}', space=sflag, size = 0x4, scoped, tag = 'scoped memory for tpu_custom_call.1']
    #allocation5 [shape = 'u8[65536]{0}', space=vmem, size = 0x10000, scoped, tag = 'input window, operand 1, single buffered']
    #allocation6 [shape = 's32[1]{0}', space=sflag, size = 0x4, scoped, tag = 'scoped memory for tpu_custom_call.1']
    #allocation7 [shape = 'u8[4096]{0}', space=vmem, size = 0x1000, scoped, tag = 'output window, operand 0, single buffered']
    #allocation8 [shape = 'u8[32768]{0}', space=vmem, size = 0x8000, scoped, tag = 'output window, operand 1, single buffered']
    #allocation9 [shape = 's32[1]{0}', space=sflag, size = 0x4, scoped, tag = 'scoped memory for tpu_custom_call.1']
    #allocation10 [shape = 'u8[4096]{0}', space=vmem, size = 0x1000, scoped, tag = 'output window, operand 2, single buffered']
    %11 = vsyncpa [#allocation3], 0
    %12 = vsyncpa [#allocation6], 0
    %13 = vsyncpa [#allocation4], 0
    %14 = vsyncpa [#allocation9], 0
    // Predicated region
    $region2: #{tpu_custom_call.1} parent=1 // pred_check
      _
    $region3: #{tpu_custom_call.1} parent=1 // pred_check_branch
      %16 = sbr.rel (0) target = $region5
    $region4: #{tpu_custom_call.1} parent=1 // pred_region
      %s18 = ssub.s32 256, 256
      %19 = vsyncadd [#allocation3], %s18
      %s20 = sshll.u32 [#allocation2], 4
      %s21 = int_to_ptr.vmem [resolvable:$true] %s20
      %26 = dma.hbm_to_vmem [thread:$0]  %s0, 256, %s21, [#allocation3], 128, 128, 8
    $region5: #{tpu_custom_call.1} parent=1 // pred_fallthru
      _
    // Predicated region
    $region6: #{tpu_custom_call.1} parent=1 // pred_check
      _
    $region7: #{tpu_custom_call.1} parent=1 // pred_check_branch
      %28 = sbr.rel (0) target = $region9
    $region8: #{tpu_custom_call.1} parent=1 // pred_region
      %s30 = ssub.s32 2048, 2048
      %31 = vsyncadd [#allocation6], %s30
      %s32 = sshll.u32 [#allocation5], 4
      %s33 = int_to_ptr.vmem [resolvable:$true] %s32
      %38 = dma.hbm_to_vmem [thread:$0]  %s1, 2048, %s33, [#allocation6], 128, 128, 8
    $region9: #{tpu_custom_call.1} parent=1 // pred_fallthru
      _
    // Predicated region
    $region10: #{tpu_custom_call.1} parent=1 // pred_check
      _
    $region11: #{tpu_custom_call.1} parent=1 // pred_check_branch
      %40 = sbr.rel (0) target = $region13
    $region12: #{tpu_custom_call.1} parent=1 // pred_region
      _
    $region13: #{tpu_custom_call.1} parent=1 // pred_fallthru
      _
    // Predicated region
    $region14: #{tpu_custom_call.1} parent=1 // pred_check
      _
    $region15: #{tpu_custom_call.1} parent=1 // pred_check_branch
      %42 = sbr.rel (0) target = $region17
    $region16: #{tpu_custom_call.1} parent=1 // pred_region
      %43 = dma.done [#allocation3], 256
    $region17: #{tpu_custom_call.1} parent=1 // pred_fallthru
      _
    // Predicated region
    $region18: #{tpu_custom_call.1} parent=1 // pred_check
      _
    $region19: #{tpu_custom_call.1} parent=1 // pred_check_branch
      %45 = sbr.rel (0) target = $region21
    $region20: #{tpu_custom_call.1} parent=1 // pred_region
      %46 = dma.done [#allocation6], 2048
    $region21: #{tpu_custom_call.1} parent=1 // pred_fallthru
      _
    %v47 = vld [vmem:[#allocation2] sm:$0xff]
    %v48 = vld [vmem:[#allocation2 + $0x8] sm:$0xff]
    %v49 = vmul.f32 %v47, %v47
    %v50 = vmul.f32 %v48, %v48
    %51 = vadd.xlane.f32.xlu0 %v49
    %v52 = vpop.xlane.xlu0 %51
    %53 = vadd.xlane.f32.xlu0 %v50
    %v54 = vpop.xlane.xlu0 %53
    %v55 = vmax.f32 %v52, 1e-16
    %v56 = vmax.f32 %v54, 1e-16
    %v57 = vrsqrt.pop %v55
    %v58 = vrsqrt.pop %v56
    %v59 = vmul.f32 %v47, %v57
    %v60 = vmul.f32 %v48, %v58
    %v61 = vld [vmem:[#allocation5] sm:$0xff]
    %v62 = vld [vmem:[#allocation5 + $0x8] sm:$0xff]
    %v63 = vld [vmem:[#allocation5 + $0x10] sm:$0xff]
    %v64 = vld [vmem:[#allocation5 + $0x18] sm:$0xff]
    %v65 = vld [vmem:[#allocation5 + $0x20] sm:$0xff]
    %v66 = vld [vmem:[#allocation5 + $0x28] sm:$0xff]
    %v67 = vld [vmem:[#allocation5 + $0x30] sm:$0xff]
    %v68 = vld [vmem:[#allocation5 + $0x38] sm:$0xff]
    %v69 = vld [vmem:[#allocation5 + $0x40] sm:$0xff]
    %v70 = vld [vmem:[#allocation5 + $0x48] sm:$0xff]
    %v71 = vld [vmem:[#allocation5 + $0x50] sm:$0xff]
    %v72 = vld [vmem:[#allocation5 + $0x58] sm:$0xff]
    %v73 = vld [vmem:[#allocation5 + $0x60] sm:$0xff]
    %v74 = vld [vmem:[#allocation5 + $0x68] sm:$0xff]
    %v75 = vld [vmem:[#allocation5 + $0x70] sm:$0xff]
    %v76 = vld [vmem:[#allocation5 + $0x78] sm:$0xff]
    %v77 = vmul.f32 %v61, %v61
    %v78 = vmul.f32 %v62, %v62
    %v79 = vmul.f32 %v63, %v63
    %v80 = vmul.f32 %v64, %v64
    %v81 = vmul.f32 %v65, %v65
    %v82 = vmul.f32 %v66, %v66
    %v83 = vmul.f32 %v67, %v67
    %v84 = vmul.f32 %v68, %v68
    %v85 = vmul.f32 %v69, %v69
    %v86 = vmul.f32 %v70, %v70
    %v87 = vmul.f32 %v71, %v71
    %v88 = vmul.f32 %v72, %v72
    %v89 = vmul.f32 %v73, %v73
    %v90 = vmul.f32 %v74, %v74
    %v91 = vmul.f32 %v75, %v75
    %v92 = vmul.f32 %v76, %v76
    %93 = vadd.xlane.f32.xlu0 %v77
    %v94 = vpop.xlane.xlu0 %93
    %95 = vadd.xlane.f32.xlu0 %v78
    %v96 = vpop.xlane.xlu0 %95
    %97 = vadd.xlane.f32.xlu0 %v79
    %v98 = vpop.xlane.xlu0 %97
    %99 = vadd.xlane.f32.xlu0 %v80
    %v100 = vpop.xlane.xlu0 %99
    %101 = vadd.xlane.f32.xlu0 %v81
    %v102 = vpop.xlane.xlu0 %101
    %103 = vadd.xlane.f32.xlu0 %v82
    %v104 = vpop.xlane.xlu0 %103
    %105 = vadd.xlane.f32.xlu0 %v83
    %v106 = vpop.xlane.xlu0 %105
    %107 = vadd.xlane.f32.xlu0 %v84
    %v108 = vpop.xlane.xlu0 %107
    %109 = vadd.xlane.f32.xlu0 %v85
    %v110 = vpop.xlane.xlu0 %109
    %111 = vadd.xlane.f32.xlu0 %v86
    %v112 = vpop.xlane.xlu0 %111
    %113 = vadd.xlane.f32.xlu0 %v87
    %v114 = vpop.xlane.xlu0 %113
    %115 = vadd.xlane.f32.xlu0 %v88
    %v116 = vpop.xlane.xlu0 %115
    %117 = vadd.xlane.f32.xlu0 %v89
    %v118 = vpop.xlane.xlu0 %117
    %119 = vadd.xlane.f32.xlu0 %v90
    %v120 = vpop.xlane.xlu0 %119
    %121 = vadd.xlane.f32.xlu0 %v91
    %v122 = vpop.xlane.xlu0 %121
    %123 = vadd.xlane.f32.xlu0 %v92
    %v124 = vpop.xlane.xlu0 %123
    %v125 = vmax.f32 %v94, 1e-16
    %v126 = vmax.f32 %v96, 1e-16
    %v127 = vmax.f32 %v98, 1e-16
    %v128 = vmax.f32 %v100, 1e-16
    %v129 = vmax.f32 %v102, 1e-16
    %v130 = vmax.f32 %v104, 1e-16
    %v131 = vmax.f32 %v106, 1e-16
    %v132 = vmax.f32 %v108, 1e-16
    %v133 = vmax.f32 %v110, 1e-16
    %v134 = vmax.f32 %v112, 1e-16
    %v135 = vmax.f32 %v114, 1e-16
    %v136 = vmax.f32 %v116, 1e-16
    %v137 = vmax.f32 %v118, 1e-16
    %v138 = vmax.f32 %v120, 1e-16
    %v139 = vmax.f32 %v122, 1e-16
    %v140 = vmax.f32 %v124, 1e-16
    %v141 = vrsqrt.pop %v125
    %v142 = vrsqrt.pop %v126
    %v143 = vrsqrt.pop %v127
    %v144 = vrsqrt.pop %v128
    %v145 = vrsqrt.pop %v129
    %v146 = vrsqrt.pop %v130
    %v147 = vrsqrt.pop %v131
    %v148 = vrsqrt.pop %v132
    %v149 = vrsqrt.pop %v133
    %v150 = vrsqrt.pop %v134
    %v151 = vrsqrt.pop %v135
    %v152 = vrsqrt.pop %v136
    %v153 = vrsqrt.pop %v137
    %v154 = vrsqrt.pop %v138
    %v155 = vrsqrt.pop %v139
    %v156 = vrsqrt.pop %v140
    %v157 = vmul.f32 %v61, %v141
    %v158 = vmul.f32 %v62, %v142
    %v159 = vmul.f32 %v63, %v143
    %v160 = vmul.f32 %v64, %v144
    %v161 = vmul.f32 %v65, %v145
    %v162 = vmul.f32 %v66, %v146
    %v163 = vmul.f32 %v67, %v147
    %v164 = vmul.f32 %v68, %v148
    %v165 = vmul.f32 %v69, %v149
    %v166 = vmul.f32 %v70, %v150
    %v167 = vmul.f32 %v71, %v151
    %v168 = vmul.f32 %v72, %v152
    %v169 = vmul.f32 %v73, %v153
    %v170 = vmul.f32 %v74, %v154
    %v171 = vmul.f32 %v75, %v155
    %v172 = vmul.f32 %v76, %v156
    %v173 = vpack.c.bf16 %v60, %v59
    %v175 = vunpack.c.l.b16 %v173
    %v176 = vunpack.c.h.b16 %v173
    %v177 = vpack.c.b16 %v175, %v175
    %v178 = vpack.c.b16 %v176, %v176
    %181 = vst [vmem:[#allocation7] sm:$0xf] %v177
    %182 = vst [vmem:[#allocation7 + $0x4] sm:$0xf] %v178
    %v183 = vpack.c.bf16 %v158, %v157
    %v184 = vpack.c.bf16 %v160, %v159
    %v185 = vpack.c.bf16 %v162, %v161
    %v186 = vpack.c.bf16 %v164, %v163
    %v187 = vpack.c.bf16 %v166, %v165
    %v188 = vpack.c.bf16 %v168, %v167
    %v189 = vpack.c.bf16 %v170, %v169
    %v190 = vpack.c.bf16 %v172, %v171
    %v199 = vunpack.c.l.b16 %v183
    %v200 = vunpack.c.h.b16 %v183
    %v201 = vunpack.c.l.b16 %v184
    %v202 = vunpack.c.h.b16 %v184
    %v203 = vunpack.c.l.b16 %v185
    %v204 = vunpack.c.h.b16 %v185
    %v205 = vunpack.c.l.b16 %v186
    %v206 = vunpack.c.h.b16 %v186
    %v207 = vunpack.c.l.b16 %v187
    %v208 = vunpack.c.h.b16 %v187
    %v209 = vunpack.c.l.b16 %v188
    %v210 = vunpack.c.h.b16 %v188
    %v211 = vunpack.c.l.b16 %v189
    %v212 = vunpack.c.h.b16 %v189
    %v213 = vunpack.c.l.b16 %v190
    %v214 = vunpack.c.h.b16 %v190
    %v215 = vpack.c.b16 %v199, %v199
    %v216 = vpack.c.b16 %v200, %v200
    %v217 = vpack.c.b16 %v201, %v201
    %v218 = vpack.c.b16 %v202, %v202
    %v219 = vpack.c.b16 %v203, %v203
    %v220 = vpack.c.b16 %v204, %v204
    %v221 = vpack.c.b16 %v205, %v205
    %v222 = vpack.c.b16 %v206, %v206
    %v223 = vpack.c.b16 %v207, %v207
    %v224 = vpack.c.b16 %v208, %v208
    %v225 = vpack.c.b16 %v209, %v209
    %v226 = vpack.c.b16 %v210, %v210
    %v227 = vpack.c.b16 %v211, %v211
    %v228 = vpack.c.b16 %v212, %v212
    %v229 = vpack.c.b16 %v213, %v213
    %v230 = vpack.c.b16 %v214, %v214
    %247 = vst [vmem:[#allocation8] sm:$0xf] %v215
    %248 = vst [vmem:[#allocation8 + $0x4] sm:$0xf] %v216
    %249 = vst [vmem:[#allocation8 + $0x8] sm:$0xf] %v217
    %250 = vst [vmem:[#allocation8 + $0xc] sm:$0xf] %v218
    %251 = vst [vmem:[#allocation8 + $0x10] sm:$0xf] %v219
    %252 = vst [vmem:[#allocation8 + $0x14] sm:$0xf] %v220
    %253 = vst [vmem:[#allocation8 + $0x18] sm:$0xf] %v221
    %254 = vst [vmem:[#allocation8 + $0x1c] sm:$0xf] %v222
    %255 = vst [vmem:[#allocation8 + $0x20] sm:$0xf] %v223
    %256 = vst [vmem:[#allocation8 + $0x24] sm:$0xf] %v224
    %257 = vst [vmem:[#allocation8 + $0x28] sm:$0xf] %v225
    %258 = vst [vmem:[#allocation8 + $0x2c] sm:$0xf] %v226
    %259 = vst [vmem:[#allocation8 + $0x30] sm:$0xf] %v227
    %260 = vst [vmem:[#allocation8 + $0x34] sm:$0xf] %v228
    %261 = vst [vmem:[#allocation8 + $0x38] sm:$0xf] %v229
    %262 = vst [vmem:[#allocation8 + $0x3c] sm:$0xf] %v230
    %v263 = vlaneseq
    %v264 = vand.u32 %v263, 127
    %v265 = vld [vmem:[%s2] sm:$0xff]
    %266 = vset.pattern.permute.xlu0 0
    %267 = vperm.xlu0 %266, %v265
    %v268 = vpop.permute.xlu0 %267
    %vm269 = vcmp.eq.s32.totalorder %v264, %v268
    %v270 = vsel %vm269, 1, 0
    %v271 = vcvt.s32.f32 %v270
    %vm272 = vcmask 130048
    %v274 = vsel %vm272, %v271, 0
    %276 = vmatprep.subr.mxu0 0.0
    %277 = vmatpush1.msra.mxu0 %v59
    %278 = vmatprep.subr.mxu0 0.0
    %279 = vmatpush1.msra.mxu0 %v60
    %280 = vmatprep.subr.mxu0 0.0
    %281 = vmatpush1.msra.mxu0 0.0
    %282 = vmatprep.subr.mxu0 0.0
    %283 = vmatpush1.msra.mxu0 0.0
    %284 = vmatprep.subr.mxu0 0.0
    %285 = vmatpush1.msra.mxu0 0.0
    %286 = vmatprep.subr.mxu0 0.0
    %287 = vmatpush1.msra.mxu0 0.0
    %288 = vmatprep.subr.mxu0 0.0
    %289 = vmatpush1.msra.mxu0 0.0
    %290 = vmatprep.subr.mxu0 0.0
    %291 = vmatpush1.msra.mxu0 0.0
    %292 = vmatprep.subr.mxu0 0.0
    %293 = vmatpush1.msra.mxu0 0.0
    %294 = vmatprep.subr.mxu0 0.0
    %295 = vmatpush1.msra.mxu0 0.0
    %296 = vmatprep.subr.mxu0 0.0
    %297 = vmatpush1.msra.mxu0 0.0
    %298 = vmatprep.subr.mxu0 0.0
    %299 = vmatpush1.msra.mxu0 0.0
    %300 = vmatprep.subr.mxu0 0.0
    %301 = vmatpush1.msra.mxu0 0.0
    %302 = vmatprep.subr.mxu0 0.0
    %303 = vmatpush1.msra.mxu0 0.0
    %304 = vmatprep.subr.mxu0 0.0
    %305 = vmatpush1.msra.mxu0 0.0
    %306 = vmatprep.subr.mxu0 0.0
    %307 = vmatpush1.msra.mxu0 0.0
    %308 = vmatprep.subr.mxu0 0.0
    %309 = vmatpush1.msra.mxu0 0.0
    %310 = vmatprep.subr.mxu0 0.0
    %311 = vmatpush1.msra.mxu0 0.0
    %312 = vmatprep.subr.mxu0 0.0
    %313 = vmatpush1.msra.mxu0 0.0
    %314 = vmatprep.subr.mxu0 0.0
    %315 = vmatpush1.msra.mxu0 0.0
    %316 = vmatprep.subr.mxu0 0.0
    %317 = vmatpush1.msra.mxu0 0.0
    %318 = vmatprep.subr.mxu0 0.0
    %319 = vmatpush1.msra.mxu0 0.0
    %320 = vmatprep.subr.mxu0 0.0
    %321 = vmatpush1.msra.mxu0 0.0
    %322 = vmatprep.subr.mxu0 0.0
    %323 = vmatpush1.msra.mxu0 0.0
    %324 = vmatprep.subr.mxu0 0.0
    %325 = vmatpush1.msra.mxu0 0.0
    %326 = vmatprep.subr.mxu0 0.0
    %327 = vmatpush1.msra.mxu0 0.0
    %328 = vmatprep.subr.mxu0 0.0
    %329 = vmatpush1.msra.mxu0 0.0
    %330 = vmatprep.subr.mxu0 0.0
    %331 = vmatpush1.msra.mxu0 0.0
    %332 = vmatprep.subr.mxu0 0.0
    %333 = vmatpush1.msra.mxu0 0.0
    %334 = vmatprep.subr.mxu0 0.0
    %335 = vmatpush1.msra.mxu0 0.0
    %336 = vmatprep.subr.mxu0 0.0
    %337 = vmatpush1.msra.mxu0 0.0
    %338 = vmatprep.subr.mxu0 0.0
    %339 = vmatpush1.msra.mxu0 0.0
    %340 = vmatprep.mubr.f32.mxu0 0.0
    %341 = vmatmul.mubr.f32.gmra.mrb[0].mxu0 %v274
    %v342 = vpop.f32.mrb[0].mxu0
    %v343 = vadd.f32 0.0, %v342
    %v344 = vpop.f32.mrb[0].mxu0
    %345 = vdwg.mxu0
    %346 = vmatprep.subr.mxu0 0.0
    %347 = vmatpush1.xpose.msra.mxu0 %v157
    %348 = vmatprep.subr.mxu0 0.0
    %349 = vmatpush1.xpose.msra.mxu0 %v158
    %350 = vmatprep.subr.mxu0 0.0
    %351 = vmatpush1.xpose.msra.mxu0 %v159
    %352 = vmatprep.subr.mxu0 0.0
    %353 = vmatpush1.xpose.msra.mxu0 %v160
    %354 = vmatprep.subr.mxu0 0.0
    %355 = vmatpush1.xpose.msra.mxu0 %v161
    %356 = vmatprep.subr.mxu0 0.0
    %357 = vmatpush1.xpose.msra.mxu0 %v162
    %358 = vmatprep.subr.mxu0 0.0
    %359 = vmatpush1.xpose.msra.mxu0 %v163
    %360 = vmatprep.subr.mxu0 0.0
    %361 = vmatpush1.xpose.msra.mxu0 %v164
    %362 = vmatprep.subr.mxu0 0.0
    %363 = vmatpush1.xpose.msra.mxu0 %v165
    %364 = vmatprep.subr.mxu0 0.0
    %365 = vmatpush1.xpose.msra.mxu0 %v166
    %366 = vmatprep.subr.mxu0 0.0
    %367 = vmatpush1.xpose.msra.mxu0 %v167
    %368 = vmatprep.subr.mxu0 0.0
    %369 = vmatpush1.xpose.msra.mxu0 %v168
    %370 = vmatprep.subr.mxu0 0.0
    %371 = vmatpush1.xpose.msra.mxu0 %v169
    %372 = vmatprep.subr.mxu0 0.0
    %373 = vmatpush1.xpose.msra.mxu0 %v170
    %374 = vmatprep.subr.mxu0 0.0
    %375 = vmatpush1.xpose.msra.mxu0 %v171
    %376 = vmatprep.subr.mxu0 0.0
    %377 = vmatpush1.xpose.msra.mxu0 %v172
    %378 = vmatprep.subr.mxu0 0.0
    %379 = vmatpush1.xpose.msra.mxu0 0.0
    %380 = vmatprep.subr.mxu0 0.0
    %381 = vmatpush1.xpose.msra.mxu0 0.0
    %382 = vmatprep.subr.mxu0 0.0
    %383 = vmatpush1.xpose.msra.mxu0 0.0
    %384 = vmatprep.subr.mxu0 0.0
    %385 = vmatpush1.xpose.msra.mxu0 0.0
    %386 = vmatprep.subr.mxu0 0.0
    %387 = vmatpush1.xpose.msra.mxu0 0.0
    %388 = vmatprep.subr.mxu0 0.0
    %389 = vmatpush1.xpose.msra.mxu0 0.0
    %390 = vmatprep.subr.mxu0 0.0
    %391 = vmatpush1.xpose.msra.mxu0 0.0
    %392 = vmatprep.subr.mxu0 0.0
    %393 = vmatpush1.xpose.msra.mxu0 0.0
    %394 = vmatprep.subr.mxu0 0.0
    %395 = vmatpush1.xpose.msra.mxu0 0.0
    %396 = vmatprep.subr.mxu0 0.0
    %397 = vmatpush1.xpose.msra.mxu0 0.0
    %398 = vmatprep.subr.mxu0 0.0
    %399 = vmatpush1.xpose.msra.mxu0 0.0
    %400 = vmatprep.subr.mxu0 0.0
    %401 = vmatpush1.xpose.msra.mxu0 0.0
    %402 = vmatprep.subr.mxu0 0.0
    %403 = vmatpush1.xpose.msra.mxu0 0.0
    %404 = vmatprep.subr.mxu0 0.0
    %405 = vmatpush1.xpose.msra.mxu0 0.0
    %406 = vmatprep.subr.mxu0 0.0
    %407 = vmatpush1.xpose.msra.mxu0 0.0
    %408 = vmatprep.subr.mxu0 0.0
    %409 = vmatpush1.xpose.msra.mxu0 0.0
    %410 = vmatprep.mubr.f32.mxu0 0.0
    %411 = vmatmul.mubr.f32.gmra.mrb[0].mxu0 %v343
    %v412 = vpop.f32.mrb[0].mxu0
    %v413 = vadd.f32 0.0, %v412
    %v414 = vpop.f32.mrb[0].mxu0
    %415 = vdwg.mxu0
    %v416 = vsub.f32 0.0, %v413
    %417 = vst [vmem:[#allocation10] sm:$0xff] %v416
    // Predicated region
    $region22: #{tpu_custom_call.1} parent=1 // pred_check
      _
    $region23: #{tpu_custom_call.1} parent=1 // pred_check_branch
      %419 = sbr.rel (0) target = $region25
    $region24: #{tpu_custom_call.1} parent=1 // pred_region
      %s421 = ssub.s32 128, 128
      %422 = vsyncadd [#allocation4], %s421
      %s423 = sshll.u32 [#allocation7], 4
      %s424 = int_to_ptr.vmem [resolvable:$true] %s423
      %429 = dma.vmem_to_hbm [thread:$0]  %s424, 128, %s3, [#allocation4], 64, 64, 4
    $region25: #{tpu_custom_call.1} parent=1 // pred_fallthru
      _
    // Predicated region
    $region26: #{tpu_custom_call.1} parent=1 // pred_check
      _
    $region27: #{tpu_custom_call.1} parent=1 // pred_check_branch
      %431 = sbr.rel (0) target = $region29
    $region28: #{tpu_custom_call.1} parent=1 // pred_region
      %s433 = ssub.s32 1024, 1024
      %434 = vsyncadd [#allocation9], %s433
      %s435 = sshll.u32 [#allocation8], 4
      %s436 = int_to_ptr.vmem [resolvable:$true] %s435
      %441 = dma.vmem_to_hbm [thread:$0]  %s436, 1024, %s4, [#allocation9], 64, 64, 4
    $region29: #{tpu_custom_call.1} parent=1 // pred_fallthru
      _
    // Predicated region
    $region30: #{tpu_custom_call.1} parent=1 // pred_check
      _
    $region31: #{tpu_custom_call.1} parent=1 // pred_check_branch
      %443 = sbr.rel (0) target = $region33
    $region32: #{tpu_custom_call.1} parent=1 // pred_region
      %s445 = ssub.s32 128, 128
      %446 = vsyncadd [#allocation9], %s445
      %s448 = sshll.u32 [#allocation10], 4
      %s449 = int_to_ptr.vmem [resolvable:$true] %s448
      %451 = dma.vmem_to_hbm [thread:$0]  %s449, 128, %s5, [#allocation9]
    $region33: #{tpu_custom_call.1} parent=1 // pred_fallthru
      _
    // Predicated region
    $region34: #{tpu_custom_call.1} parent=1 // pred_check
      _
    $region35: #{tpu_custom_call.1} parent=1 // pred_check_branch
      %453 = sbr.rel (0) target = $region37
    $region36: #{tpu_custom_call.1} parent=1 // pred_region
      %454 = dma.done [#allocation4], 128
    $region37: #{tpu_custom_call.1} parent=1 // pred_fallthru
      _
    // Predicated region
    $region38: #{tpu_custom_call.1} parent=1 // pred_check
      _
    $region39: #{tpu_custom_call.1} parent=1 // pred_check_branch
      %456 = sbr.rel (0) target = $region41
    $region40: #{tpu_custom_call.1} parent=1 // pred_region
      %457 = dma.done [#allocation9], 1024
    $region41: #{tpu_custom_call.1} parent=1 // pred_fallthru
      _
    // Predicated region
    $region42: #{tpu_custom_call.1} parent=1 // pred_check
      _
    $region43: #{tpu_custom_call.1} parent=1 // pred_check_branch
      %459 = sbr.rel (0) target = $region45
    $region44: #{tpu_custom_call.1} parent=1 // pred_region
      %460 = dma.done [#allocation9], 128
    $region45: #{tpu_custom_call.1} parent=1 // pred_fallthru
      _
    %461 = vsyncpa [#allocation3], 1
    %462 = vsyncpa [#allocation6], 1
    %463 = vsyncpa [#allocation4], 1
    %464 = vsyncpa [#allocation9], 1

</llo_original>
